<compile_context>
chip_gen: v6e
topology: v6e:2x2x1
jax: 0.10.0
libtpu: 0.0.40
codegen_flags: <defaults>
</compile_context>

<pallas_src>
import functools
import math

import numpy as np
import jax
import jax.numpy as jnp
from jax.experimental import pallas as pl
from jax.experimental.pallas import tpu as pltpu


def _convblock_kernel(x_ref, w1_ref, b1_ref, w2_ref, b2_ref, seam_ref, o_ref,
                      p1_ref, col1_ref, p2_ref, col2_ref, *, KH, KW, H, W):
    """conv1+ReLU -> conv2+ReLU for one batch element, channel-major layout.

    x_ref   : (Cin, M)            input tile, M = H*W (compute dtype)
    w1_ref  : (Cmid, KH*KW*Cin)   conv1 weights as a GEMM matrix
    b1_ref  : (Cmid, 1) f32
    w2_ref  : (Cout, KH*KW*Cmid)  conv2 weights
    b2_ref  : (Cout, 1) f32
    seam_ref: (KW, M) f32         1.0 where tap kw reads a real pixel, 0.0 where
                                  the flat layout would wrap into the next row
    o_ref   : (Cout, M)           un-pooled conv2 output
    p1_ref  : (Cin,  M + 2*OFF)   flat zero-haloed conv1 input, OFF = ph*W + pw
    col1_ref: (KH*KW*Cin,  M)     conv1 im2col slab
    p2_ref  : (Cmid, M + 2*OFF)   flat zero-haloed conv2 input
    col2_ref: (KH*KW*Cmid, M)     conv2 im2col slab
    """
    M = H * W
    ph, pw = (KH - 1) // 2, (KW - 1) // 2
    OFF = ph * W + pw                       # halo lanes before/after interior

    def im2col(pad_ref, col_ref, C):
        # One contiguous lane-slice per tap, written once into the VMEM slab.
        for kh in range(KH):
            for kw in range(KW):
                off = kh * W + kw
                patch = pad_ref[:, off:off + M]
                if kw != pw:                                    # row-seam taps
                    keep = seam_ref[kw:kw + 1, :] > 0.5         # (1, M)
                    patch = jnp.where(keep, patch, jnp.zeros_like(patch))
                t = kh * KW + kw
                col_ref[t * C:(t + 1) * C, :] = patch

    def conv(x_val, pad_ref, col_ref, w_ref, b_ref):
        C = x_val.shape[0]
        # Zero only the halo strips; the interior is fully overwritten next.
        # Re-done every grid step: the batch axis is 'parallel' and may be
        # sharded across TensorCores, so a program_id==0 init would be unsafe.
        if OFF > 0:
            halo = jnp.zeros((C, OFF), pad_ref.dtype)
            pad_ref[:, 0:OFF] = halo
            pad_ref[:, OFF + M:OFF + M + OFF] = halo
        pad_ref[:, OFF:OFF + M] = x_val
        im2col(pad_ref, col_ref, C)
        acc = jnp.dot(w_ref[...], col_ref[...],
                      preferred_element_type=jnp.float32)       # one MXU GEMM
        return jnp.maximum(acc + b_ref[...], 0.0)               # f32, lane-dense

    z1 = conv(x_ref[...], p1_ref, col1_ref, w1_ref, b1_ref)
    # TODO(synk): dropout between conv1 and conv2 is training-only; omitted.
    z2 = conv(z1.astype(p2_ref.dtype), p2_ref, col2_ref, w2_ref, b2_ref)
    o_ref[...] = z2.astype(o_ref.dtype)


def convblock_fused(x_nchw, w1, b1, w2, b2, *, pool=1,
                    compute_dtype=jnp.bfloat16, out_dtype=None):
    """Fused ConvBlock.  x_nchw: (N, C, H, W); w*: (KH, KW, Ci, Co); b*: (Co,).

    conv1 -> ReLU -> conv2 -> ReLU run in one pallas_call (grid over batch);
    MaxPool2d((1, pool)) runs as an XLA epilogue on the block output.
    """
    N, Cin, H, W = x_nchw.shape
    KH, KW, _, Cmid = w1.shape
    _, _, _, Cout = w2.shape
    if KH % 2 == 0 or KW % 2 == 0:
        # TODO(synk): even kernels need PyTorch's asymmetric 'same' padding.
        raise NotImplementedError("only odd kernel sizes are supported")
    M = H * W
    ph, pw = (KH - 1) // 2, (KW - 1) // 2
    OFF = ph * W + pw
    L = M + 2 * OFF
    K1, K2 = KH * KW * Cin, KH * KW * Cmid
    cdt = compute_dtype or x_nchw.dtype
    odt = out_dtype or x_nchw.dtype

    # NCHW is already channel-major: flattening (H, W) is free, no transpose.
    x2 = x_nchw.reshape(N, Cin, M).astype(cdt)
    # GEMM weight matrices: row = output channel, cols ordered (kh, kw, cin)
    # to match the im2col slab row order (tap-major, channel-minor).
    w1m = jnp.transpose(w1, (3, 0, 1, 2)).reshape(Cmid, K1).astype(cdt)
    w2m = jnp.transpose(w2, (3, 0, 1, 2)).reshape(Cout, K2).astype(cdt)
    b1c = b1.reshape(Cmid, 1).astype(jnp.float32)
    b2c = b2.reshape(Cout, 1).astype(jnp.float32)

    # Seam masks: in the flat (no per-row gap) padded layout, tap kw would read
    # the neighbouring row for the first/last |kw - pw| columns of each row.
    col_idx = np.arange(M) % W
    seam = np.zeros((KW, M), np.float32)
    for kw in range(KW):
        lo, hi = max(0, pw - kw), min(W, W + pw - kw)
        seam[kw] = ((col_idx >= lo) & (col_idx < hi)).astype(np.float32)
    seam = jnp.asarray(seam)

    kern = functools.partial(_convblock_kernel, KH=KH, KW=KW, H=H, W=W)

    # Explicit VMEM budget: scratch + double-buffered blocks + live f32 values.
    esz = jnp.dtype(cdt).itemsize
    osz = jnp.dtype(odt).itemsize
    scratch_bytes = ((Cin + Cmid) * L + (K1 + K2) * M) * esz
    block_bytes = 2 * (Cin * M * esz + Cout * M * osz
                       + (Cmid * K1 + Cout * K2) * esz
                       + (Cmid + Cout) * 4 + KW * M * 4)
    live_bytes = 2 * (Cmid + Cout) * M * 4
    vmem_limit = max(32 << 20, min(64 << 20, int(1.5 * (
        scratch_bytes + block_bytes + live_bytes)) + (8 << 20)))

    out = pl.pallas_call(
        kern,
        out_shape=jax.ShapeDtypeStruct((N, Cout, M), odt),
        grid_spec=pltpu.PrefetchScalarGridSpec(
            num_scalar_prefetch=0,
            grid=(N,),
            in_specs=[
                pl.BlockSpec((None, Cin, M), lambda n: (n, 0, 0)),
                pl.BlockSpec((Cmid, K1), lambda n: (0, 0)),
                pl.BlockSpec((Cmid, 1), lambda n: (0, 0)),
                pl.BlockSpec((Cout, K2), lambda n: (0, 0)),
                pl.BlockSpec((Cout, 1), lambda n: (0, 0)),
                pl.BlockSpec((KW, M), lambda n: (0, 0)),
            ],
            out_specs=pl.BlockSpec((None, Cout, M), lambda n: (n, 0, 0)),
            scratch_shapes=[
                pltpu.VMEM((Cin, L), cdt),
                pltpu.VMEM((K1, M), cdt),
                pltpu.VMEM((Cmid, L), cdt),
                pltpu.VMEM((K2, M), cdt),
            ],
        ),
        compiler_params=pltpu.CompilerParams(
            dimension_semantics=("parallel",),     # shards batch across cores
            vmem_limit_bytes=vmem_limit),
    )(x2, w1m, b1c, w2m, b2c, seam)

    z = out.reshape(N, Cout, H, W)
    # MaxPool2d((1, pool)), floor mode.  Decimating every pool-th LANE has no
    # cheap Mosaic primitive, so it runs as an XLA epilogue on the block output.
    # TODO(synk): fuse the pool (phase-split GEMM columns) to save an HBM pass.
    if pool > 1:
        Wp = W // pool
        z = z[..., :Wp * pool].reshape(N, Cout, H, Wp, pool).max(axis=-1)
    return z


def init_prelayer_params(key, input_size, spec):
    """Deterministic (PyTorch-Conv2d-style uniform) parameter init."""
    params = []
    cur = input_size
    for s in spec:
        out, k = s['outputSize'], s['kernelSize']
        key, k1, k2, k3, k4 = jax.random.split(key, 5)
        s1 = 1.0 / math.sqrt(cur * k * k)
        s2 = 1.0 / math.sqrt(out * k * k)
        params.append(dict(
            w1=jax.random.uniform(k1, (k, k, cur, out), jnp.float32, -s1, s1),
            b1=jax.random.uniform(k2, (out,), jnp.float32, -s1, s1),
            w2=jax.random.uniform(k3, (k, k, out, out), jnp.float32, -s2, s2),
            b2=jax.random.uniform(k4, (out,), jnp.float32, -s2, s2),
            pool=s.get('poolSize', 1),
        ))
        cur = out
    return params


def prelayer_forward(x_nchw, params, dummy, *, compute_dtype=jnp.bfloat16):
    """PreLayer.forward (inference).

    `z = x + 0*dummy` is a numerical identity kept in torch only for autograd;
    torch.utils.checkpoint is an inference no-op.  Activations stay NCHW end to
    end (kernels are channel-major), so no layout transposes are needed.
    """
    del dummy
    final_dtype = x_nchw.dtype
    z = x_nchw
    for i, p in enumerate(params):
        last = i == len(params) - 1
        z = convblock_fused(z, p['w1'], p['b1'], p['w2'], p['b2'],
                            pool=p['pool'],
                            compute_dtype=compute_dtype,
                            out_dtype=final_dtype if last else compute_dtype)
    return z


# ---------------- numpy reference (for correctness check) ----------------
def _round_to(x, dtype):
    """Mirror the kernel's operand casts (bf16 round-trip) in the reference."""
    return np.asarray(jnp.asarray(np.asarray(x)).astype(dtype).astype(jnp.float32))


def _ref_conv_nchw(x, w, b):
    N, Cin, H, W = x.shape
    KH, KW, _, Cout = w.shape
    ph, pw = (KH - 1) // 2, (KW - 1) // 2
    xp = np.pad(x, ((0, 0), (0, 0), (ph, ph), (pw, pw)))
    out = np.zeros((N, Cout, H, W), np.float32)
    for kh in range(KH):
        for kw in range(KW):
            out += np.einsum('nchw,co->nohw',
                             xp[:, :, kh:kh + H, kw:kw + W], np.asarray(w[kh, kw]))
    return out + np.asarray(b)[None, :, None, None]


def ref_forward(x_nchw, params, compute_dtype=jnp.bfloat16):
    z = np.asarray(x_nchw, np.float32)
    for i, p in enumerate(params):
        last = i == len(params) - 1
        z = _round_to(z, compute_dtype)
        w1 = _round_to(p['w1'], compute_dtype)
        w2 = _round_to(p['w2'], compute_dtype)
        z = np.maximum(_ref_conv_nchw(z, w1, p['b1']), 0.0)
        z = _round_to(z, compute_dtype)
        z = np.maximum(_ref_conv_nchw(z, w2, p['b2']), 0.0)
        z = _round_to(z, jnp.float32 if last else compute_dtype)
        pool = p['pool']
        if pool > 1:
            N, C, H, W = z.shape
            Wp = W // pool
            z = z[:, :, :, :Wp * pool].reshape(N, C, H, Wp, pool).max(axis=4)
    return z


if __name__ == "__main__":
    key = jax.random.PRNGKey(0)
    N, inputSize, H, nEntry = 2, 4, 8, 16
    spec = [
        {'outputSize': 8,  'kernelSize': 3, 'poolSize': 2, 'dropoutProb': 0.1},
        {'outputSize': 16, 'kernelSize': 3, 'poolSize': 2, 'dropoutProb': 0.1},
    ]
    kx, kp = jax.random.split(key)
    x = jax.random.normal(kx, (N, inputSize, H, nEntry), jnp.float32)   # NCHW
    params = init_prelayer_params(kp, inputSize, spec)
    dummy = jnp.ones((1,), jnp.float32)          # PreLayer.dummy

    out = jax.block_until_ready(prelayer_forward(x, params, dummy))

    ref = ref_forward(x, params)
    assert out.shape == ref.shape == (N, 16, H, nEntry // 4), (out.shape, ref.shape)
    out_np = np.asarray(out, np.float32)
    err = float(np.max(np.abs(out_np - ref)))
    assert np.allclose(out_np, ref, rtol=1e-2, atol=1e-2), err
    print("KERNEL_OK")
</pallas_src>

<mosaic_0001>
module attributes {stable_mosaic.version = 11 : i64} {
  func.func @_convblock_kernel(%arg0: i32, %arg1: memref<1x4x128xbf16, #tpu.memory_space<vmem>>, %arg2: memref<8x36xbf16, #tpu.memory_space<vmem>>, %arg3: memref<8x1xf32, #tpu.memory_space<vmem>>, %arg4: memref<8x72xbf16, #tpu.memory_space<vmem>>, %arg5: memref<8x1xf32, #tpu.memory_space<vmem>>, %arg6: memref<3x128xf32, #tpu.memory_space<vmem>>, %arg7: memref<1x8x128xbf16, #tpu.memory_space<vmem>>, %arg8: memref<4x162xbf16, #tpu.memory_space<vmem>>, %arg9: memref<36x128xbf16, #tpu.memory_space<vmem>>, %arg10: memref<8x162xbf16, #tpu.memory_space<vmem>>, %arg11: memref<72x128xbf16, #tpu.memory_space<vmem>>) attributes {dimension_semantics = [#tpu.dimension_semantics<parallel>], iteration_bounds = array<i64: 2>, scalar_prefetch = 0 : i64, scratch_operands = 4 : i64, tpu.core_type = #tpu.core_type<tc>, window_params = [{transform_indices = @transform_0, window_bounds = array<i64: 1, 4, 128>}, {pipeline_mode = #tpu.pipeline_mode<synchronous>, transform_indices = @transform_1, window_bounds = array<i64: 8, 36>}, {pipeline_mode = #tpu.pipeline_mode<synchronous>, transform_indices = @transform_2, window_bounds = array<i64: 8, 1>}, {pipeline_mode = #tpu.pipeline_mode<synchronous>, transform_indices = @transform_3, window_bounds = array<i64: 8, 72>}, {pipeline_mode = #tpu.pipeline_mode<synchronous>, transform_indices = @transform_4, window_bounds = array<i64: 8, 1>}, {pipeline_mode = #tpu.pipeline_mode<synchronous>, transform_indices = @transform_5, window_bounds = array<i64: 3, 128>}, {transform_indices = @transform_6, window_bounds = array<i64: 1, 8, 128>}]} {
    %c0 = arith.constant 0 : index
    %c0_0 = arith.constant 0 : index
    %c0_1 = arith.constant 0 : index
    %0 = vector.load %arg1[%c0, %c0_0, %c0_1] : memref<1x4x128xbf16, #tpu.memory_space<vmem>>, vector<1x4x128xbf16>
    %1 = vector.shape_cast %0 : vector<1x4x128xbf16> to vector<4x128xbf16>
    %cst = arith.constant 0.000000e+00 : bf16
    %2 = vector.broadcast %cst : bf16 to vector<4x17xbf16>
    %c0_2 = arith.constant 0 : index
    %c0_3 = arith.constant 0 : index
    %3 = vector.load %arg8[%c0_2, %c0_3] : memref<4x162xbf16, #tpu.memory_space<vmem>>, vector<4x17xbf16>
    tpu.vector_store %arg8[%c0_2, %c0_3], %2 {strides = array<i32>} : memref<4x162xbf16, #tpu.memory_space<vmem>>, vector<4x17xbf16>,
    %c0_4 = arith.constant 0 : index
    %c145 = arith.constant 145 : index
    %4 = vector.load %arg8[%c0_4, %c145] : memref<4x162xbf16, #tpu.memory_space<vmem>>, vector<4x17xbf16>
    tpu.vector_store %arg8[%c0_4, %c145], %2 {strides = array<i32>} : memref<4x162xbf16, #tpu.memory_space<vmem>>, vector<4x17xbf16>,
    %c0_5 = arith.constant 0 : index
    %c17 = arith.constant 17 : index
    %5 = vector.load %arg8[%c0_5, %c17] : memref<4x162xbf16, #tpu.memory_space<vmem>>, vector<4x128xbf16>
    tpu.vector_store %arg8[%c0_5, %c17], %1 {strides = array<i32>} : memref<4x162xbf16, #tpu.memory_space<vmem>>, vector<4x128xbf16>,
    %c0_6 = arith.constant 0 : index
    %c0_7 = arith.constant 0 : index
    %6 = vector.load %arg8[%c0_6, %c0_7] : memref<4x162xbf16, #tpu.memory_space<vmem>>, vector<4x128xbf16>
    %c0_8 = arith.constant 0 : index
    %c0_9 = arith.constant 0 : index
    %7 = vector.load %arg6[%c0_8, %c0_9] : memref<3x128xf32, #tpu.memory_space<vmem>>, vector<1x128xf32>
    %cst_10 = arith.constant 5.000000e-01 : f32
    %8 = vector.broadcast %cst_10 : f32 to vector<1x128xf32>
    %9 = arith.cmpf ogt, %7, %8 : vector<1x128xf32>
    %cst_11 = arith.constant 0.000000e+00 : bf16
    %10 = vector.broadcast %cst_11 : bf16 to vector<4x128xbf16>
    %11 = vector.shape_cast %9 : vector<1x128xi1> to vector<1x128xi1>
    %12 = vector.broadcast %11 : vector<1x128xi1> to vector<4x128xi1>
    %13 = arith.select %12, %6, %10 : vector<4x128xi1>, vector<4x128xbf16>
    %c0_12 = arith.constant 0 : index
    %c0_13 = arith.constant 0 : index
    %14 = vector.load %arg9[%c0_12, %c0_13] : memref<36x128xbf16, #tpu.memory_space<vmem>>, vector<4x128xbf16>
    tpu.vector_store %arg9[%c0_12, %c0_13], %13 {strides = array<i32>} : memref<36x128xbf16, #tpu.memory_space<vmem>>, vector<4x128xbf16>,
    %c0_14 = arith.constant 0 : index
    %c1 = arith.constant 1 : index
    %15 = vector.load %arg8[%c0_14, %c1] : memref<4x162xbf16, #tpu.memory_space<vmem>>, vector<4x128xbf16>
    %c4 = arith.constant 4 : index
    %c0_15 = arith.constant 0 : index
    %16 = vector.load %arg9[%c4, %c0_15] : memref<36x128xbf16, #tpu.memory_space<vmem>>, vector<4x128xbf16>
    tpu.vector_store %arg9[%c4, %c0_15], %15 {strides = array<i32>} : memref<36x128xbf16, #tpu.memory_space<vmem>>, vector<4x128xbf16>,
    %c0_16 = arith.constant 0 : index
    %c2 = arith.constant 2 : index
    %17 = vector.load %arg8[%c0_16, %c2] : memref<4x162xbf16, #tpu.memory_space<vmem>>, vector<4x128xbf16>
    %c2_17 = arith.constant 2 : index
    %c0_18 = arith.constant 0 : index
    %18 = vector.load %arg6[%c2_17, %c0_18] : memref<3x128xf32, #tpu.memory_space<vmem>>, vector<1x128xf32>
    %cst_19 = arith.constant 5.000000e-01 : f32
    %19 = vector.broadcast %cst_19 : f32 to vector<1x128xf32>
    %20 = arith.cmpf ogt, %18, %19 : vector<1x128xf32>
    %cst_20 = arith.constant 0.000000e+00 : bf16
    %21 = vector.broadcast %cst_20 : bf16 to vector<4x128xbf16>
    %22 = vector.shape_cast %20 : vector<1x128xi1> to vector<1x128xi1>
    %23 = vector.broadcast %22 : vector<1x128xi1> to vector<4x128xi1>
    %24 = arith.select %23, %17, %21 : vector<4x128xi1>, vector<4x128xbf16>
    %c8 = arith.constant 8 : index
    %c0_21 = arith.constant 0 : index
    %25 = vector.load %arg9[%c8, %c0_21] : memref<36x128xbf16, #tpu.memory_space<vmem>>, vector<4x128xbf16>
    tpu.vector_store %arg9[%c8, %c0_21], %24 {strides = array<i32>} : memref<36x128xbf16, #tpu.memory_space<vmem>>, vector<4x128xbf16>,
    %c0_22 = arith.constant 0 : index
    %c16 = arith.constant 16 : index
    %26 = vector.load %arg8[%c0_22, %c16] : memref<4x162xbf16, #tpu.memory_space<vmem>>, vector<4x128xbf16>
    %c0_23 = arith.constant 0 : index
    %c0_24 = arith.constant 0 : index
    %27 = vector.load %arg6[%c0_23, %c0_24] : memref<3x128xf32, #tpu.memory_space<vmem>>, vector<1x128xf32>
    %cst_25 = arith.constant 5.000000e-01 : f32
    %28 = vector.broadcast %cst_25 : f32 to vector<1x128xf32>
    %29 = arith.cmpf ogt, %27, %28 : vector<1x128xf32>
    %cst_26 = arith.constant 0.000000e+00 : bf16
    %30 = vector.broadcast %cst_26 : bf16 to vector<4x128xbf16>
    %31 = vector.shape_cast %29 : vector<1x128xi1> to vector<1x128xi1>
    %32 = vector.broadcast %31 : vector<1x128xi1> to vector<4x128xi1>
    %33 = arith.select %32, %26, %30 : vector<4x128xi1>, vector<4x128xbf16>
    %c12 = arith.constant 12 : index
    %c0_27 = arith.constant 0 : index
    %34 = vector.load %arg9[%c12, %c0_27] : memref<36x128xbf16, #tpu.memory_space<vmem>>, vector<4x128xbf16>
    tpu.vector_store %arg9[%c12, %c0_27], %33 {strides = array<i32>} : memref<36x128xbf16, #tpu.memory_space<vmem>>, vector<4x128xbf16>,
    %c0_28 = arith.constant 0 : index
    %c17_29 = arith.constant 17 : index
    %35 = vector.load %arg8[%c0_28, %c17_29] : memref<4x162xbf16, #tpu.memory_space<vmem>>, vector<4x128xbf16>
    %c16_30 = arith.constant 16 : index
    %c0_31 = arith.constant 0 : index
    %36 = vector.load %arg9[%c16_30, %c0_31] : memref<36x128xbf16, #tpu.memory_space<vmem>>, vector<4x128xbf16>
    tpu.vector_store %arg9[%c16_30, %c0_31], %35 {strides = array<i32>} : memref<36x128xbf16, #tpu.memory_space<vmem>>, vector<4x128xbf16>,
    %c0_32 = arith.constant 0 : index
    %c18 = arith.constant 18 : index
    %37 = vector.load %arg8[%c0_32, %c18] : memref<4x162xbf16, #tpu.memory_space<vmem>>, vector<4x128xbf16>
    %c2_33 = arith.constant 2 : index
    %c0_34 = arith.constant 0 : index
    %38 = vector.load %arg6[%c2_33, %c0_34] : memref<3x128xf32, #tpu.memory_space<vmem>>, vector<1x128xf32>
    %cst_35 = arith.constant 5.000000e-01 : f32
    %39 = vector.broadcast %cst_35 : f32 to vector<1x128xf32>
    %40 = arith.cmpf ogt, %38, %39 : vector<1x128xf32>
    %cst_36 = arith.constant 0.000000e+00 : bf16
    %41 = vector.broadcast %cst_36 : bf16 to vector<4x128xbf16>
    %42 = vector.shape_cast %40 : vector<1x128xi1> to vector<1x128xi1>
    %43 = vector.broadcast %42 : vector<1x128xi1> to vector<4x128xi1>
    %44 = arith.select %43, %37, %41 : vector<4x128xi1>, vector<4x128xbf16>
    %c20 = arith.constant 20 : index
    %c0_37 = arith.constant 0 : index
    %45 = vector.load %arg9[%c20, %c0_37] : memref<36x128xbf16, #tpu.memory_space<vmem>>, vector<4x128xbf16>
    tpu.vector_store %arg9[%c20, %c0_37], %44 {strides = array<i32>} : memref<36x128xbf16, #tpu.memory_space<vmem>>, vector<4x128xbf16>,
    %c0_38 = arith.constant 0 : index
    %c32 = arith.constant 32 : index
    %46 = vector.load %arg8[%c0_38, %c32] : memref<4x162xbf16, #tpu.memory_space<vmem>>, vector<4x128xbf16>
    %c0_39 = arith.constant 0 : index
    %c0_40 = arith.constant 0 : index
    %47 = vector.load %arg6[%c0_39, %c0_40] : memref<3x128xf32, #tpu.memory_space<vmem>>, vector<1x128xf32>
    %cst_41 = arith.constant 5.000000e-01 : f32
    %48 = vector.broadcast %cst_41 : f32 to vector<1x128xf32>
    %49 = arith.cmpf ogt, %47, %48 : vector<1x128xf32>
    %cst_42 = arith.constant 0.000000e+00 : bf16
    %50 = vector.broadcast %cst_42 : bf16 to vector<4x128xbf16>
    %51 = vector.shape_cast %49 : vector<1x128xi1> to vector<1x128xi1>
    %52 = vector.broadcast %51 : vector<1x128xi1> to vector<4x128xi1>
    %53 = arith.select %52, %46, %50 : vector<4x128xi1>, vector<4x128xbf16>
    %c24 = arith.constant 24 : index
    %c0_43 = arith.constant 0 : index
    %54 = vector.load %arg9[%c24, %c0_43] : memref<36x128xbf16, #tpu.memory_space<vmem>>, vector<4x128xbf16>
    tpu.vector_store %arg9[%c24, %c0_43], %53 {strides = array<i32>} : memref<36x128xbf16, #tpu.memory_space<vmem>>, vector<4x128xbf16>,
    %c0_44 = arith.constant 0 : index
    %c33 = arith.constant 33 : index
    %55 = vector.load %arg8[%c0_44, %c33] : memref<4x162xbf16, #tpu.memory_space<vmem>>, vector<4x128xbf16>
    %c28 = arith.constant 28 : index
    %c0_45 = arith.constant 0 : index
    %56 = vector.load %arg9[%c28, %c0_45] : memref<36x128xbf16, #tpu.memory_space<vmem>>, vector<4x128xbf16>
    tpu.vector_store %arg9[%c28, %c0_45], %55 {strides = array<i32>} : memref<36x128xbf16, #tpu.memory_space<vmem>>, vector<4x128xbf16>,
    %c0_46 = arith.constant 0 : index
    %c34 = arith.constant 34 : index
    %57 = vector.load %arg8[%c0_46, %c34] : memref<4x162xbf16, #tpu.memory_space<vmem>>, vector<4x128xbf16>
    %c2_47 = arith.constant 2 : index
    %c0_48 = arith.constant 0 : index
    %58 = vector.load %arg6[%c2_47, %c0_48] : memref<3x128xf32, #tpu.memory_space<vmem>>, vector<1x128xf32>
    %cst_49 = arith.constant 5.000000e-01 : f32
    %59 = vector.broadcast %cst_49 : f32 to vector<1x128xf32>
    %60 = arith.cmpf ogt, %58, %59 : vector<1x128xf32>
    %cst_50 = arith.constant 0.000000e+00 : bf16
    %61 = vector.broadcast %cst_50 : bf16 to vector<4x128xbf16>
    %62 = vector.shape_cast %60 : vector<1x128xi1> to vector<1x128xi1>
    %63 = vector.broadcast %62 : vector<1x128xi1> to vector<4x128xi1>
    %64 = arith.select %63, %57, %61 : vector<4x128xi1>, vector<4x128xbf16>
    %c32_51 = arith.constant 32 : index
    %c0_52 = arith.constant 0 : index
    %65 = vector.load %arg9[%c32_51, %c0_52] : memref<36x128xbf16, #tpu.memory_space<vmem>>, vector<4x128xbf16>
    tpu.vector_store %arg9[%c32_51, %c0_52], %64 {strides = array<i32>} : memref<36x128xbf16, #tpu.memory_space<vmem>>, vector<4x128xbf16>,
    %c0_53 = arith.constant 0 : index
    %c0_54 = arith.constant 0 : index
    %66 = vector.load %arg2[%c0_53, %c0_54] : memref<8x36xbf16, #tpu.memory_space<vmem>>, vector<8x36xbf16>
    %c0_55 = arith.constant 0 : index
    %c0_56 = arith.constant 0 : index
    %67 = vector.load %arg9[%c0_55, %c0_56] : memref<36x128xbf16, #tpu.memory_space<vmem>>, vector<36x128xbf16>
    %cst_57 = arith.constant dense<0.000000e+00> : vector<8x128xf32>
    %68 = tpu.matmul %66, %67, %cst_57 {dimension_numbers = #tpu.dot_dimension_numbers<[1], [0], [0], [1], [0, 0, 1, 1], [], []>} : vector<8x36xbf16>, vector<36x128xbf16>, vector<8x128xf32> -> vector<8x128xf32>
    %c0_58 = arith.constant 0 : index
    %c0_59 = arith.constant 0 : index
    %69 = vector.load %arg3[%c0_58, %c0_59] : memref<8x1xf32, #tpu.memory_space<vmem>>, vector<8x1xf32>
    %70 = vector.broadcast %69 : vector<8x1xf32> to vector<8x128xf32>
    %71 = arith.addf %68, %70 : vector<8x128xf32>
    %cst_60 = arith.constant 0.000000e+00 : f32
    %72 = vector.broadcast %cst_60 : f32 to vector<8x128xf32>
    %73 = arith.maximumf %71, %72 : vector<8x128xf32>
    %74 = arith.truncf %73 : vector<8x128xf32> to vector<8x128xbf16>
    %cst_61 = arith.constant 0.000000e+00 : bf16
    %75 = vector.broadcast %cst_61 : bf16 to vector<8x17xbf16>
    %c0_62 = arith.constant 0 : index
    %c0_63 = arith.constant 0 : index
    %76 = vector.load %arg10[%c0_62, %c0_63] : memref<8x162xbf16, #tpu.memory_space<vmem>>, vector<8x17xbf16>
    tpu.vector_store %arg10[%c0_62, %c0_63], %75 {strides = array<i32>} : memref<8x162xbf16, #tpu.memory_space<vmem>>, vector<8x17xbf16>,
    %c0_64 = arith.constant 0 : index
    %c145_65 = arith.constant 145 : index
    %77 = vector.load %arg10[%c0_64, %c145_65] : memref<8x162xbf16, #tpu.memory_space<vmem>>, vector<8x17xbf16>
    tpu.vector_store %arg10[%c0_64, %c145_65], %75 {strides = array<i32>} : memref<8x162xbf16, #tpu.memory_space<vmem>>, vector<8x17xbf16>,
    %c0_66 = arith.constant 0 : index
    %c17_67 = arith.constant 17 : index
    %78 = vector.load %arg10[%c0_66, %c17_67] : memref<8x162xbf16, #tpu.memory_space<vmem>>, vector<8x128xbf16>
    tpu.vector_store %arg10[%c0_66, %c17_67], %74 {strides = array<i32>} : memref<8x162xbf16, #tpu.memory_space<vmem>>, vector<8x128xbf16>,
    %c0_68 = arith.constant 0 : index
    %c0_69 = arith.constant 0 : index
    %79 = vector.load %arg10[%c0_68, %c0_69] : memref<8x162xbf16, #tpu.memory_space<vmem>>, vector<8x128xbf16>
    %c0_70 = arith.constant 0 : index
    %c0_71 = arith.constant 0 : index
    %80 = vector.load %arg6[%c0_70, %c0_71] : memref<3x128xf32, #tpu.memory_space<vmem>>, vector<1x128xf32>
    %cst_72 = arith.constant 5.000000e-01 : f32
    %81 = vector.broadcast %cst_72 : f32 to vector<1x128xf32>
    %82 = arith.cmpf ogt, %80, %81 : vector<1x128xf32>
    %cst_73 = arith.constant 0.000000e+00 : bf16
    %83 = vector.broadcast %cst_73 : bf16 to vector<8x128xbf16>
    %84 = vector.shape_cast %82 : vector<1x128xi1> to vector<1x128xi1>
    %85 = vector.broadcast %84 : vector<1x128xi1> to vector<8x128xi1>
    %86 = arith.select %85, %79, %83 : vector<8x128xi1>, vector<8x128xbf16>
    %c0_74 = arith.constant 0 : index
    %c0_75 = arith.constant 0 : index
    %87 = vector.load %arg11[%c0_74, %c0_75] : memref<72x128xbf16, #tpu.memory_space<vmem>>, vector<8x128xbf16>
    tpu.vector_store %arg11[%c0_74, %c0_75], %86 {strides = array<i32>} : memref<72x128xbf16, #tpu.memory_space<vmem>>, vector<8x128xbf16>,
    %c0_76 = arith.constant 0 : index
    %c1_77 = arith.constant 1 : index
    %88 = vector.load %arg10[%c0_76, %c1_77] : memref<8x162xbf16, #tpu.memory_space<vmem>>, vector<8x128xbf16>
    %c8_78 = arith.constant 8 : index
    %c0_79 = arith.constant 0 : index
    %89 = vector.load %arg11[%c8_78, %c0_79] : memref<72x128xbf16, #tpu.memory_space<vmem>>, vector<8x128xbf16>
    tpu.vector_store %arg11[%c8_78, %c0_79], %88 {strides = array<i32>} : memref<72x128xbf16, #tpu.memory_space<vmem>>, vector<8x128xbf16>,
    %c0_80 = arith.constant 0 : index
    %c2_81 = arith.constant 2 : index
    %90 = vector.load %arg10[%c0_80, %c2_81] : memref<8x162xbf16, #tpu.memory_space<vmem>>, vector<8x128xbf16>
    %c2_82 = arith.constant 2 : index
    %c0_83 = arith.constant 0 : index
    %91 = vector.load %arg6[%c2_82, %c0_83] : memref<3x128xf32, #tpu.memory_space<vmem>>, vector<1x128xf32>
    %cst_84 = arith.constant 5.000000e-01 : f32
    %92 = vector.broadcast %cst_84 : f32 to vector<1x128xf32>
    %93 = arith.cmpf ogt, %91, %92 : vector<1x128xf32>
    %cst_85 = arith.constant 0.000000e+00 : bf16
    %94 = vector.broadcast %cst_85 : bf16 to vector<8x128xbf16>
    %95 = vector.shape_cast %93 : vector<1x128xi1> to vector<1x128xi1>
    %96 = vector.broadcast %95 : vector<1x128xi1> to vector<8x128xi1>
    %97 = arith.select %96, %90, %94 : vector<8x128xi1>, vector<8x128xbf16>
    %c16_86 = arith.constant 16 : index
    %c0_87 = arith.constant 0 : index
    %98 = vector.load %arg11[%c16_86, %c0_87] : memref<72x128xbf16, #tpu.memory_space<vmem>>, vector<8x128xbf16>
    tpu.vector_store %arg11[%c16_86, %c0_87], %97 {strides = array<i32>} : memref<72x128xbf16, #tpu.memory_space<vmem>>, vector<8x128xbf16>,
    %c0_88 = arith.constant 0 : index
    %c16_89 = arith.constant 16 : index
    %99 = vector.load %arg10[%c0_88, %c16_89] : memref<8x162xbf16, #tpu.memory_space<vmem>>, vector<8x128xbf16>
    %c0_90 = arith.constant 0 : index
    %c0_91 = arith.constant 0 : index
    %100 = vector.load %arg6[%c0_90, %c0_91] : memref<3x128xf32, #tpu.memory_space<vmem>>, vector<1x128xf32>
    %cst_92 = arith.constant 5.000000e-01 : f32
    %101 = vector.broadcast %cst_92 : f32 to vector<1x128xf32>
    %102 = arith.cmpf ogt, %100, %101 : vector<1x128xf32>
    %cst_93 = arith.constant 0.000000e+00 : bf16
    %103 = vector.broadcast %cst_93 : bf16 to vector<8x128xbf16>
    %104 = vector.shape_cast %102 : vector<1x128xi1> to vector<1x128xi1>
    %105 = vector.broadcast %104 : vector<1x128xi1> to vector<8x128xi1>
    %106 = arith.select %105, %99, %103 : vector<8x128xi1>, vector<8x128xbf16>
    %c24_94 = arith.constant 24 : index
    %c0_95 = arith.constant 0 : index
    %107 = vector.load %arg11[%c24_94, %c0_95] : memref<72x128xbf16, #tpu.memory_space<vmem>>, vector<8x128xbf16>
    tpu.vector_store %arg11[%c24_94, %c0_95], %106 {strides = array<i32>} : memref<72x128xbf16, #tpu.memory_space<vmem>>, vector<8x128xbf16>,
    %c0_96 = arith.constant 0 : index
    %c17_97 = arith.constant 17 : index
    %108 = vector.load %arg10[%c0_96, %c17_97] : memref<8x162xbf16, #tpu.memory_space<vmem>>, vector<8x128xbf16>
    %c32_98 = arith.constant 32 : index
    %c0_99 = arith.constant 0 : index
    %109 = vector.load %arg11[%c32_98, %c0_99] : memref<72x128xbf16, #tpu.memory_space<vmem>>, vector<8x128xbf16>
    tpu.vector_store %arg11[%c32_98, %c0_99], %108 {strides = array<i32>} : memref<72x128xbf16, #tpu.memory_space<vmem>>, vector<8x128xbf16>,
    %c0_100 = arith.constant 0 : index
    %c18_101 = arith.constant 18 : index
    %110 = vector.load %arg10[%c0_100, %c18_101] : memref<8x162xbf16, #tpu.memory_space<vmem>>, vector<8x128xbf16>
    %c2_102 = arith.constant 2 : index
    %c0_103 = arith.constant 0 : index
    %111 = vector.load %arg6[%c2_102, %c0_103] : memref<3x128xf32, #tpu.memory_space<vmem>>, vector<1x128xf32>
    %cst_104 = arith.constant 5.000000e-01 : f32
    %112 = vector.broadcast %cst_104 : f32 to vector<1x128xf32>
    %113 = arith.cmpf ogt, %111, %112 : vector<1x128xf32>
    %cst_105 = arith.constant 0.000000e+00 : bf16
    %114 = vector.broadcast %cst_105 : bf16 to vector<8x128xbf16>
    %115 = vector.shape_cast %113 : vector<1x128xi1> to vector<1x128xi1>
    %116 = vector.broadcast %115 : vector<1x128xi1> to vector<8x128xi1>
    %117 = arith.select %116, %110, %114 : vector<8x128xi1>, vector<8x128xbf16>
    %c40 = arith.constant 40 : index
    %c0_106 = arith.constant 0 : index
    %118 = vector.load %arg11[%c40, %c0_106] : memref<72x128xbf16, #tpu.memory_space<vmem>>, vector<8x128xbf16>
    tpu.vector_store %arg11[%c40, %c0_106], %117 {strides = array<i32>} : memref<72x128xbf16, #tpu.memory_space<vmem>>, vector<8x128xbf16>,
    %c0_107 = arith.constant 0 : index
    %c32_108 = arith.constant 32 : index
    %119 = vector.load %arg10[%c0_107, %c32_108] : memref<8x162xbf16, #tpu.memory_space<vmem>>, vector<8x128xbf16>
    %c0_109 = arith.constant 0 : index
    %c0_110 = arith.constant 0 : index
    %120 = vector.load %arg6[%c0_109, %c0_110] : memref<3x128xf32, #tpu.memory_space<vmem>>, vector<1x128xf32>
    %cst_111 = arith.constant 5.000000e-01 : f32
    %121 = vector.broadcast %cst_111 : f32 to vector<1x128xf32>
    %122 = arith.cmpf ogt, %120, %121 : vector<1x128xf32>
    %cst_112 = arith.constant 0.000000e+00 : bf16
    %123 = vector.broadcast %cst_112 : bf16 to vector<8x128xbf16>
    %124 = vector.shape_cast %122 : vector<1x128xi1> to vector<1x128xi1>
    %125 = vector.broadcast %124 : vector<1x128xi1> to vector<8x128xi1>
    %126 = arith.select %125, %119, %123 : vector<8x128xi1>, vector<8x128xbf16>
    %c48 = arith.constant 48 : index
    %c0_113 = arith.constant 0 : index
    %127 = vector.load %arg11[%c48, %c0_113] : memref<72x128xbf16, #tpu.memory_space<vmem>>, vector<8x128xbf16>
    tpu.vector_store %arg11[%c48, %c0_113], %126 {strides = array<i32>} : memref<72x128xbf16, #tpu.memory_space<vmem>>, vector<8x128xbf16>,
    %c0_114 = arith.constant 0 : index
    %c33_115 = arith.constant 33 : index
    %128 = vector.load %arg10[%c0_114, %c33_115] : memref<8x162xbf16, #tpu.memory_space<vmem>>, vector<8x128xbf16>
    %c56 = arith.constant 56 : index
    %c0_116 = arith.constant 0 : index
    %129 = vector.load %arg11[%c56, %c0_116] : memref<72x128xbf16, #tpu.memory_space<vmem>>, vector<8x128xbf16>
    tpu.vector_store %arg11[%c56, %c0_116], %128 {strides = array<i32>} : memref<72x128xbf16, #tpu.memory_space<vmem>>, vector<8x128xbf16>,
    %c0_117 = arith.constant 0 : index
    %c34_118 = arith.constant 34 : index
    %130 = vector.load %arg10[%c0_117, %c34_118] : memref<8x162xbf16, #tpu.memory_space<vmem>>, vector<8x128xbf16>
    %c2_119 = arith.constant 2 : index
    %c0_120 = arith.constant 0 : index
    %131 = vector.load %arg6[%c2_119, %c0_120] : memref<3x128xf32, #tpu.memory_space<vmem>>, vector<1x128xf32>
    %cst_121 = arith.constant 5.000000e-01 : f32
    %132 = vector.broadcast %cst_121 : f32 to vector<1x128xf32>
    %133 = arith.cmpf ogt, %131, %132 : vector<1x128xf32>
    %cst_122 = arith.constant 0.000000e+00 : bf16
    %134 = vector.broadcast %cst_122 : bf16 to vector<8x128xbf16>
    %135 = vector.shape_cast %133 : vector<1x128xi1> to vector<1x128xi1>
    %136 = vector.broadcast %135 : vector<1x128xi1> to vector<8x128xi1>
    %137 = arith.select %136, %130, %134 : vector<8x128xi1>, vector<8x128xbf16>
    %c64 = arith.constant 64 : index
    %c0_123 = arith.constant 0 : index
    %138 = vector.load %arg11[%c64, %c0_123] : memref<72x128xbf16, #tpu.memory_space<vmem>>, vector<8x128xbf16>
    tpu.vector_store %arg11[%c64, %c0_123], %137 {strides = array<i32>} : memref<72x128xbf16, #tpu.memory_space<vmem>>, vector<8x128xbf16>,
    %c0_124 = arith.constant 0 : index
    %c0_125 = arith.constant 0 : index
    %139 = vector.load %arg4[%c0_124, %c0_125] : memref<8x72xbf16, #tpu.memory_space<vmem>>, vector<8x72xbf16>
    %c0_126 = arith.constant 0 : index
    %c0_127 = arith.constant 0 : index
    %140 = vector.load %arg11[%c0_126, %c0_127] : memref<72x128xbf16, #tpu.memory_space<vmem>>, vector<72x128xbf16>
    %cst_128 = arith.constant dense<0.000000e+00> : vector<8x128xf32>
    %141 = tpu.matmul %139, %140, %cst_128 {dimension_numbers = #tpu.dot_dimension_numbers<[1], [0], [0], [1], [0, 0, 1, 1], [], []>} : vector<8x72xbf16>, vector<72x128xbf16>, vector<8x128xf32> -> vector<8x128xf32>
    %c0_129 = arith.constant 0 : index
    %c0_130 = arith.constant 0 : index
    %142 = vector.load %arg5[%c0_129, %c0_130] : memref<8x1xf32, #tpu.memory_space<vmem>>, vector<8x1xf32>
    %143 = vector.broadcast %142 : vector<8x1xf32> to vector<8x128xf32>
    %144 = arith.addf %141, %143 : vector<8x128xf32>
    %cst_131 = arith.constant 0.000000e+00 : f32
    %145 = vector.broadcast %cst_131 : f32 to vector<8x128xf32>
    %146 = arith.maximumf %144, %145 : vector<8x128xf32>
    %147 = arith.truncf %146 : vector<8x128xf32> to vector<8x128xbf16>
    %c0_132 = arith.constant 0 : index
    %c0_133 = arith.constant 0 : index
    %c0_134 = arith.constant 0 : index
    %148 = vector.load %arg7[%c0_132, %c0_133, %c0_134] : memref<1x8x128xbf16, #tpu.memory_space<vmem>>, vector<1x8x128xbf16>
    %149 = vector.shape_cast %148 : vector<1x8x128xbf16> to vector<8x128xbf16>
    %150 = vector.shape_cast %147 : vector<8x128xbf16> to vector<1x8x128xbf16>
    tpu.vector_store %arg7[%c0_132, %c0_133, %c0_134], %150 {strides = array<i32>} : memref<1x8x128xbf16, #tpu.memory_space<vmem>>, vector<1x8x128xbf16>,
    return
  }
  func.func @transform_0(%arg0: i32) -> (i32, i32, i32) {
    %c0_i32 = arith.constant 0 : i32
    %c0_i32_0 = arith.constant 0 : i32
    %c0_i32_1 = arith.constant 0 : i32
    return %arg0, %c0_i32, %c0_i32_0 : i32, i32, i32
  }
  func.func @transform_1(%arg0: i32) -> (i32, i32) {
    %c0_i32 = arith.constant 0 : i32
    %c0_i32_0 = arith.constant 0 : i32
    %c0_i32_1 = arith.constant 0 : i32
    return %c0_i32, %c0_i32_0 : i32, i32
  }
  func.func @transform_2(%arg0: i32) -> (i32, i32) {
    %c0_i32 = arith.constant 0 : i32
    %c0_i32_0 = arith.constant 0 : i32
    %c0_i32_1 = arith.constant 0 : i32
    return %c0_i32, %c0_i32_0 : i32, i32
  }
  func.func @transform_3(%arg0: i32) -> (i32, i32) {
    %c0_i32 = arith.constant 0 : i32
    %c0_i32_0 = arith.constant 0 : i32
    %c0_i32_1 = arith.constant 0 : i32
    return %c0_i32, %c0_i32_0 : i32, i32
  }
  func.func @transform_4(%arg0: i32) -> (i32, i32) {
    %c0_i32 = arith.constant 0 : i32
    %c0_i32_0 = arith.constant 0 : i32
    %c0_i32_1 = arith.constant 0 : i32
    return %c0_i32, %c0_i32_0 : i32, i32
  }
  func.func @transform_5(%arg0: i32) -> (i32, i32) {
    %c0_i32 = arith.constant 0 : i32
    %c0_i32_0 = arith.constant 0 : i32
    %c0_i32_1 = arith.constant 0 : i32
    return %c0_i32, %c0_i32_0 : i32, i32
  }
  func.func @transform_6(%arg0: i32) -> (i32, i32, i32) {
    %c0_i32 = arith.constant 0 : i32
    %c0_i32_0 = arith.constant 0 : i32
    %c0_i32_1 = arith.constant 0 : i32
    return %arg0, %c0_i32, %c0_i32_0 : i32, i32, i32
  }
}

</mosaic_0001>

<llo_original>
// kernel: tpu_custom_call.1
$region0: #{tpu_custom_call.1}
  #allocation0 [shape = 'u32[]', space=smem, size = 0x4, offset = 0x4, fixed_abs, tag = 'smem constant byte address 0x4 - core index']
  #allocation1 [shape = 'u32[144,128]{1,0:T(1,128)}', space=vmem, size = 0x12000, scoped, tag = 'internal scratch']
  #allocation2 [shape = 'bf16[4,162]{1,0:T(4,128)(2,1)}', space=vmem, size = 0x800, scoped, tag = 'scratch operand']
  #allocation3 [shape = 'bf16[36,128]{1,0:T(8,128)(2,1)}', space=vmem, size = 0x2800, scoped, tag = 'scratch operand']
  #allocation4 [shape = 'bf16[8,162]{1,0:T(8,128)(2,1)}', space=vmem, size = 0x1000, scoped, tag = 'scratch operand']
  #allocation5 [shape = 'bf16[72,128]{1,0:T(8,128)(2,1)}', space=vmem, size = 0x4800, scoped, tag = 'scratch operand']
  %s0 = inlined_call_operand.vmem [shape: bf16[2,4,128], index: 0, kind: input, shape index: {}]
  %s1 = inlined_call_operand.vmem [shape: bf16[8,36], index: 1, kind: input, shape index: {}]
  %s2 = inlined_call_operand.vmem [shape: f32[8,1], index: 2, kind: input, shape index: {}]
  %s3 = inlined_call_operand.vmem [shape: bf16[8,72], index: 3, kind: input, shape index: {}]
  %s4 = inlined_call_operand.vmem [shape: f32[8,1], index: 4, kind: input, shape index: {}]
  %s5 = inlined_call_operand.vmem [shape: f32[3,128], index: 5, kind: input, shape index: {}]
  %s6 = inlined_call_operand.hbm [shape: bf16[2,8,128], index: 6, kind: output, shape index: {}]
  %s7 = sld [smem:[#allocation0]]
  $region57: #{tpu_custom_call.1} parent=0
    _
  %s9 = ssub.s32 1, %s7
  %s10 = scalar_select 0, %s9, %s7
  $region1: #{tpu_custom_call.1} parent=0
    #allocation6 [shape = 'u8[4096]{0}', space=vmem, size = 0x1000, scoped, tag = 'output window, operand 0']
    #allocation7 [shape = 's32[2]{0}', space=sflag, size = 0x8, scoped, tag = 'scoped memory for tpu_custom_call.1']
    %11 = vsyncpa [#allocation7], 0
    %s12 = scalar_lea.sflag [#allocation7], 1
    %13 = vsyncpa %s12, 0
    loop: start=0, step=1, limit=4
    $region2: #{tpu_custom_call.1} parent=1 // loop_pre_header
      _
    $region3: #{tpu_custom_call.1} parent=1 // loop_header
      %s15 = sphi 0, %s19
      %p16 = scmp.ge.s32.totalorder %s15, 4
      %s25 = sphi 0, %s27
      %s28 = sphi 0, %s25
      %s29 = sphi 0, %s28
      %s45 = sphi 0, %s29
      %s49 = sphi 0, %s49
      %s51 = sphi 0, %s49
      %s52 = sphi 0, %s51
      %s66 = sphi 0, %s52
      %s70 = sphi 0, %s70
      %s72 = sphi 0, %s70
      %s73 = sphi 0, %s72
      %s87 = sphi 0, %s73
      %s91 = sphi 0, %s91
      %s93 = sphi 0, %s91
      %s94 = sphi 0, %s93
      %s108 = sphi 0, %s94
      %s112 = sphi 0, %s112
      %s114 = sphi 0, %s112
      %s115 = sphi 0, %s114
      %s129 = sphi 0, %s115
      %s133 = sphi 0, %s133
      %s135 = sphi 0, %s133
      %s136 = sphi 0, %s135
      %s150 = sphi 0, %s136
      %s156 = sphi 0, %s158
      %s159 = sphi 0, %s156
      %s160 = sphi 0, %s159
      %s176 = sphi 0, %s160
    $region4: #{tpu_custom_call.1} parent=1 // loop_header_branch
      %18 = sbr.rel (%p16) target = $region8
    $region5: #{tpu_custom_call.1} parent=1 // loop_body
      %s20 = ssub.s32 %s15, 1
      %s21 = ssub.s32 %s15, 2
      %s22 = sadd.s32 %s15, 1
      %s23 = ssub.s32 %s15, %s22
      %p24 = scmp.eq.s32.totalorder %s23, 0
      %s26 = sadd.s32 %s25, 1
      %s27 = scalar_select %p24, %s25, %s26
      %p30 = pneg %p24
      %p31 = scmp.eq.s32.totalorder %s15, 1
      %p32 = por %p30, %p31
      %p33 = scmp.ne.s32.totalorder %s25, %s28
      %p34 = scmp.eq.s32.totalorder %s15, 0
      %p35 = por %p33, %p34
      %p36 = scmp.ne.s32.totalorder %s25, %s28
      %p37 = scmp.eq.s32.totalorder %s20, 1
      %p38 = por %p36, %p37
      %p39 = scmp.ne.s32.totalorder %s28, %s29
      %p40 = scmp.eq.s32.totalorder %s20, 0
      %p41 = por %p39, %p40
      %p42 = scmp.ne.s32.totalorder %s28, %s29
      %p43 = scmp.eq.s32.totalorder %s21, 1
      %p44 = por %p42, %p43
      %p46 = scmp.ne.s32.totalorder %s29, %s45
      %p47 = scmp.eq.s32.totalorder %s21, 0
      %p48 = por %p46, %p47
      %s50 = sadd.s32 %s49, 1
      %p53 = scmp.eq.s32.totalorder %s15, 1
      %p54 = scmp.ne.s32.totalorder %s49, %s51
      %p55 = scmp.eq.s32.totalorder %s15, 0
      %p56 = por %p54, %p55
      %p57 = scmp.ne.s32.totalorder %s49, %s51
      %p58 = scmp.eq.s32.totalorder %s20, 1
      %p59 = por %p57, %p58
      %p60 = scmp.ne.s32.totalorder %s51, %s52
      %p61 = scmp.eq.s32.totalorder %s20, 0
      %p62 = por %p60, %p61
      %p63 = scmp.ne.s32.totalorder %s51, %s52
      %p64 = scmp.eq.s32.totalorder %s21, 1
      %p65 = por %p63, %p64
      %p67 = scmp.ne.s32.totalorder %s52, %s66
      %p68 = scmp.eq.s32.totalorder %s21, 0
      %p69 = por %p67, %p68
      %s71 = sadd.s32 %s70, 1
      %p74 = scmp.eq.s32.totalorder %s15, 1
      %p75 = scmp.ne.s32.totalorder %s70, %s72
      %p76 = scmp.eq.s32.totalorder %s15, 0
      %p77 = por %p75, %p76
      %p78 = scmp.ne.s32.totalorder %s70, %s72
      %p79 = scmp.eq.s32.totalorder %s20, 1
      %p80 = por %p78, %p79
      %p81 = scmp.ne.s32.totalorder %s72, %s73
      %p82 = scmp.eq.s32.totalorder %s20, 0
      %p83 = por %p81, %p82
      %p84 = scmp.ne.s32.totalorder %s72, %s73
      %p85 = scmp.eq.s32.totalorder %s21, 1
      %p86 = por %p84, %p85
      %p88 = scmp.ne.s32.totalorder %s73, %s87
      %p89 = scmp.eq.s32.totalorder %s21, 0
      %p90 = por %p88, %p89
      %s92 = sadd.s32 %s91, 1
      %p95 = scmp.eq.s32.totalorder %s15, 1
      %p96 = scmp.ne.s32.totalorder %s91, %s93
      %p97 = scmp.eq.s32.totalorder %s15, 0
      %p98 = por %p96, %p97
      %p99 = scmp.ne.s32.totalorder %s91, %s93
      %p100 = scmp.eq.s32.totalorder %s20, 1
      %p101 = por %p99, %p100
      %p102 = scmp.ne.s32.totalorder %s93, %s94
      %p103 = scmp.eq.s32.totalorder %s20, 0
      %p104 = por %p102, %p103
      %p105 = scmp.ne.s32.totalorder %s93, %s94
      %p106 = scmp.eq.s32.totalorder %s21, 1
      %p107 = por %p105, %p106
      %p109 = scmp.ne.s32.totalorder %s94, %s108
      %p110 = scmp.eq.s32.totalorder %s21, 0
      %p111 = por %p109, %p110
      %s113 = sadd.s32 %s112, 1
      %p116 = scmp.eq.s32.totalorder %s15, 1
      %p117 = scmp.ne.s32.totalorder %s112, %s114
      %p118 = scmp.eq.s32.totalorder %s15, 0
      %p119 = por %p117, %p118
      %p120 = scmp.ne.s32.totalorder %s112, %s114
      %p121 = scmp.eq.s32.totalorder %s20, 1
      %p122 = por %p120, %p121
      %p123 = scmp.ne.s32.totalorder %s114, %s115
      %p124 = scmp.eq.s32.totalorder %s20, 0
      %p125 = por %p123, %p124
      %p126 = scmp.ne.s32.totalorder %s114, %s115
      %p127 = scmp.eq.s32.totalorder %s21, 1
      %p128 = por %p126, %p127
      %p130 = scmp.ne.s32.totalorder %s115, %s129
      %p131 = scmp.eq.s32.totalorder %s21, 0
      %p132 = por %p130, %p131
      %s134 = sadd.s32 %s133, 1
      %p137 = scmp.eq.s32.totalorder %s15, 1
      %p138 = scmp.ne.s32.totalorder %s133, %s135
      %p139 = scmp.eq.s32.totalorder %s15, 0
      %p140 = por %p138, %p139
      %p141 = scmp.ne.s32.totalorder %s133, %s135
      %p142 = scmp.eq.s32.totalorder %s20, 1
      %p143 = por %p141, %p142
      %p144 = scmp.ne.s32.totalorder %s135, %s136
      %p145 = scmp.eq.s32.totalorder %s20, 0
      %p146 = por %p144, %p145
      %p147 = scmp.ne.s32.totalorder %s135, %s136
      %p148 = scmp.eq.s32.totalorder %s21, 1
      %p149 = por %p147, %p148
      %p151 = scmp.ne.s32.totalorder %s136, %s150
      %p152 = scmp.eq.s32.totalorder %s21, 0
      %p153 = por %p151, %p152
      %s154 = ssub.s32 %s15, %s22
      %p155 = scmp.eq.s32.totalorder %s154, 0
      %s157 = sadd.s32 %s156, 1
      %s158 = scalar_select %p155, %s156, %s157
      %p161 = pneg %p155
      %p162 = scmp.eq.s32.totalorder %s15, 1
      %p163 = por %p161, %p162
      %p164 = scmp.ne.s32.totalorder %s156, %s159
      %p165 = scmp.eq.s32.totalorder %s15, 0
      %p166 = por %p164, %p165
      %p167 = scmp.ne.s32.totalorder %s156, %s159
      %p168 = scmp.eq.s32.totalorder %s20, 1
      %p169 = por %p167, %p168
      %p170 = scmp.ne.s32.totalorder %s159, %s160
      %p171 = scmp.eq.s32.totalorder %s20, 0
      %p172 = por %p170, %p171
      %p173 = scmp.ne.s32.totalorder %s159, %s160
      %p174 = scmp.eq.s32.totalorder %s21, 1
      %p175 = por %p173, %p174
      %p177 = scmp.ne.s32.totalorder %s160, %s176
      %p178 = scmp.eq.s32.totalorder %s21, 0
      %p179 = por %p177, %p178
      %p180 = scmp.le.s32.totalorder 1, %s15
      %p181 = scmp.lt.s32.totalorder %s15, 3
      %p182 = pnand %p180, %p181
      %p183 = pneg %p182
      // Predicated region
      $region9: #{tpu_custom_call.1} parent=5 // pred_check
        _
      $region10: #{tpu_custom_call.1} parent=5 // pred_check_branch
        %185 = sbr.rel (%p182) target = $region12
      $region11: #{tpu_custom_call.1} parent=5 // pred_region
        %s186 = ssub.s32 %s15, 1
        // Predicated region
        $region13: #{tpu_custom_call.1} parent=11 // pred_check
          %p187 = pneg %p62
        $region14: #{tpu_custom_call.1} parent=11 // pred_check_branch
          %189 = sbr.rel (%p187) target = $region16
        $region15: #{tpu_custom_call.1} parent=11 // pred_region
          _
        $region16: #{tpu_custom_call.1} parent=11 // pred_fallthru
          _
        // Predicated region
        $region17: #{tpu_custom_call.1} parent=11 // pred_check
          %p190 = pneg %p83
        $region18: #{tpu_custom_call.1} parent=11 // pred_check_branch
          %192 = sbr.rel (%p190) target = $region20
        $region19: #{tpu_custom_call.1} parent=11 // pred_region
          _
        $region20: #{tpu_custom_call.1} parent=11 // pred_fallthru
          _
        // Predicated region
        $region21: #{tpu_custom_call.1} parent=11 // pred_check
          %p193 = pneg %p104
        $region22: #{tpu_custom_call.1} parent=11 // pred_check_branch
          %195 = sbr.rel (%p193) target = $region24
        $region23: #{tpu_custom_call.1} parent=11 // pred_region
          _
        $region24: #{tpu_custom_call.1} parent=11 // pred_fallthru
          _
        // Predicated region
        $region25: #{tpu_custom_call.1} parent=11 // pred_check
          %p196 = pneg %p125
        $region26: #{tpu_custom_call.1} parent=11 // pred_check_branch
          %198 = sbr.rel (%p196) target = $region28
        $region27: #{tpu_custom_call.1} parent=11 // pred_region
          _
        $region28: #{tpu_custom_call.1} parent=11 // pred_fallthru
          _
        // Predicated region
        $region29: #{tpu_custom_call.1} parent=11 // pred_check
          %p199 = pneg %p146
        $region30: #{tpu_custom_call.1} parent=11 // pred_check_branch
          %201 = sbr.rel (%p199) target = $region32
        $region31: #{tpu_custom_call.1} parent=11 // pred_region
          _
        $region32: #{tpu_custom_call.1} parent=11 // pred_fallthru
          _
      $region12: #{tpu_custom_call.1} parent=5 // pred_fallthru
        _
      %p202 = scmp.lt.s32.totalorder %s15, 2
      // Predicated region
      $region33: #{tpu_custom_call.1} parent=5 // pred_check
        %p203 = pneg %p202
      $region34: #{tpu_custom_call.1} parent=5 // pred_check_branch
        %205 = sbr.rel (%p203) target = $region36
      $region35: #{tpu_custom_call.1} parent=5 // pred_region
        // Predicated region
        $region37: #{tpu_custom_call.1} parent=35 // pred_check
          %p206 = pneg %p35
        $region38: #{tpu_custom_call.1} parent=35 // pred_check_branch
          %208 = sbr.rel (%p206) target = $region40
        $region39: #{tpu_custom_call.1} parent=35 // pred_region
          %p209 = scmp.lt.s32.totalorder %s15, 1
          %s210 = scalar_select %p209, %s15, 1
          %s211 = smul.addr %s210, 2
          %s212 = scalar_lea.vmem %s0, %s211
        $region40: #{tpu_custom_call.1} parent=35 // pred_fallthru
          _
      $region36: #{tpu_custom_call.1} parent=5 // pred_fallthru
        _
      %p213 = scmp.le.s32.totalorder 1, %s15
      %p214 = scmp.lt.s32.totalorder %s15, 3
      %p215 = pnand %p213, %p214
      %p216 = pneg %p215
      // Predicated region
      $region41: #{tpu_custom_call.1} parent=5 // pred_check
        _
      $region42: #{tpu_custom_call.1} parent=5 // pred_check_branch
        %218 = sbr.rel (%p215) target = $region44
      $region43: #{tpu_custom_call.1} parent=5 // pred_region
        %s219 = ssub.s32 %s15, 1
        %p220 = scmp.lt.s32.totalorder %s20, 1
        %s221 = scalar_select %p220, %s20, 1
        %s222 = smul.addr %s221, 2
        %s223 = scalar_lea.vmem %s0, %s222
        %p224 = pneg %p41
        %p225 = pneg %p38
        %p226 = pneg %p62
        %p227 = pneg %p59
        %p228 = pneg %p83
        %p229 = pneg %p80
        %p230 = pneg %p104
        %p231 = pneg %p101
        %p232 = pneg %p125
        %p233 = pneg %p122
        %p234 = pneg %p146
        %p235 = pneg %p143
        %p236 = pneg %p172
        %p237 = pneg %p169
        %s238 = sand.u32 %s159, 1
        %s239 = scalar_lea.sflag [#allocation7], %s238
        %s240 = sand.u32 %s159, 1
        %s241 = smul.addr %s240, 4
        %s242 = scalar_lea.vmem [#allocation6], %s241
        %p243 = scmp.lt.s32.totalorder %s20, 1
        %s244 = scalar_select %p243, %s20, 1
        %s245 = smul.addr %s244, 2
        %s246 = scalar_lea.vmem %s0, %s245
        %v250 = vld [vmem:[%s246] sm:$0x3]
        %vm251 = vcmask 132096
        %252 = vst.msk [vmem:[#allocation2] sm:$0x3] %vm251, 0
        %vm253 = vcmask 271496
        %254 = vst.msk [vmem:[#allocation2 + $0x2] sm:$0x3] %vm253, 0
        %256 = vrot.lane.b32.xlu0 %v250, 17
        %v257 = vpop.permute.xlu0 %256
        %v258 = vrot.slane %v257, 6
        %vm259 = vcmask 138240
        %v260 = vsel %vm259, %v258, %v257
        %vm262 = vcmask 1041544
        %vm263 = vcmask 134146
        %vm264 = vmor %vm263, %vm262
        %265 = vst.msk [vmem:[#allocation2] sm:$0xf] %vm264, %v260
        %v266 = vld [vmem:[#allocation2] sm:$0x3]
        %v267 = vld [vmem:[%s5] sm:$0x1]
        %vm268 = vcmp.gt.f32.partialorder %v267, 0.5
        %v269 = vsel %vm268, 1, 0
        %v270 = vlaneseq
        %v271 = vshrl.u32 %v270, 7
        %v272 = vsub.s32 0, %v271
        %v273 = vrot.slane %v269, %v272
        %vm274 = vcmp.eq.s32.totalorder %v273, 1
        %v275 = vsel %vm274, 1, 0
        %v276 = vpack.c.b16 %v275, %v275
        %vm277 = vcmp.ne.s16.totalorder %v276, 0
        %v278 = vsel %vm277, %v266, 0
        %279 = vst [vmem:[#allocation3] sm:$0x3] %v278
        %v280 = vld [vmem:[#allocation2] sm:$0xf]
        %v282 = vcombine.low %v280, %v280
        %v284 = vunpack.c.l.s4 1983009808
        %v285 = vunpack.c.0.s8 %v284
        %v286 = vlaneseq
        %v287 = vshrl.u32 %v286, 7
        %v288 = vsub.s32 %v285, %v287
        %v289 = vrot.slane %v282, %v288
        %290 = vrot.lane.b32.xlu0 %v289, 127
        %v291 = vpop.permute.xlu0 %290
        %v292 = vrot.slane %v291, 4
        %vm293 = vcmask 1039360
        %v294 = vsel %vm293, %v291, %v292
        %296 = vst [vmem:[#allocation3] sm:$0xc] %v294
        %v297 = vld [vmem:[#allocation2] sm:$0xf]
        %v298 = vld [vmem:[%s5 + $0x2] sm:$0x1]
        %vm299 = vcmp.gt.f32.partialorder %v298, 0.5
        %v300 = vsel %vm299, 1, 0
        %v301 = vlaneseq
        %v302 = vshrl.u32 %v301, 7
        %v303 = vsub.s32 0, %v302
        %v304 = vrot.slane %v300, %v303
        %vm305 = vcmp.eq.s32.totalorder %v304, 1
        %v306 = vsel %vm305, 1, 0
        %v307 = vpack.c.b16 %v306, %v306
        %vm308 = vcmp.ne.s16.totalorder %v307, 0
        %v309 = vsel %vm308, 65537, 0
        %310 = vrot.lane.b32.xlu0 %v309, 2
        %v311 = vpop.permute.xlu0 %310
        %v312 = vrot.slane %v311, 6
        %vm313 = vcmask 15360
        %v314 = vsel %vm313, %v312, %v311
        %vm315 = vcmp.ne.s16.totalorder %v314, 0
        %v316 = vsel %vm315, %v297, 0
        %v319 = vunpack.c.l.s4 1983009808
        %v320 = vunpack.c.0.s8 %v319
        %v321 = vlaneseq
        %v322 = vshrl.u32 %v321, 7
        %v323 = vsub.s32 %v320, %v322
        %v324 = vrot.slane %v316, %v323
        %325 = vrot.lane.b32.xlu0 %v324, 126
        %v326 = vpop.permute.xlu0 %325
        %v327 = vrot.slane %v326, 4
        %vm328 = vcmask 1031168
        %v329 = vsel %vm328, %v326, %v327
        %331 = vst [vmem:[#allocation3 + $0x4] sm:$0x3] %v329
        %v332 = vld [vmem:[#allocation2] sm:$0xf]
        %v333 = vld [vmem:[%s5] sm:$0x1]
        %vm334 = vcmp.gt.f32.partialorder %v333, 0.5
        %v335 = vsel %vm334, 1, 0
        %v336 = vlaneseq
        %v337 = vshrl.u32 %v336, 7
        %v338 = vsub.s32 0, %v337
        %v339 = vrot.slane %v335, %v338
        %vm340 = vcmp.eq.s32.totalorder %v339, 1
        %v341 = vsel %vm340, 1, 0
        %v342 = vpack.c.b16 %v341, %v341
        %vm343 = vcmp.ne.s16.totalorder %v342, 0
        %v344 = vsel %vm343, 65537, 0
        %345 = vrot.lane.b32.xlu0 %v344, 16
        %v346 = vpop.permute.xlu0 %345
        %v347 = vrot.slane %v346, 6
        %vm348 = vcmask 130048
        %v349 = vsel %vm348, %v347, %v346
        %vm350 = vcmp.ne.s16.totalorder %v349, 0
        %v351 = vsel %vm350, %v332, 0
        %v353 = vcombine.low %v351, %v351
        %v355 = vunpack.c.l.s4 1983009808
        %v356 = vunpack.c.0.s8 %v355
        %v357 = vlaneseq
        %v358 = vshrl.u32 %v357, 7
        %v359 = vsub.s32 %v356, %v358
        %v360 = vrot.slane %v353, %v359
        %361 = vrot.lane.b32.xlu0 %v360, 112
        %v362 = vpop.permute.xlu0 %361
        %v363 = vrot.slane %v362, 4
        %vm364 = vcmask 916480
        %v365 = vsel %vm364, %v362, %v363
        %367 = vst [vmem:[#allocation3 + $0x4] sm:$0xc] %v365
        %v368 = vld [vmem:[#allocation2] sm:$0xf]
        %v371 = vunpack.c.l.s4 1983009808
        %v372 = vunpack.c.0.s8 %v371
        %v373 = vlaneseq
        %v374 = vshrl.u32 %v373, 7
        %v375 = vsub.s32 %v372, %v374
        %v376 = vrot.slane %v368, %v375
        %377 = vrot.lane.b32.xlu0 %v376, 111
        %v378 = vpop.permute.xlu0 %377
        %v379 = vrot.slane %v378, 4
        %vm380 = vcmask 908288
        %v381 = vsel %vm380, %v378, %v379
        %383 = vst [vmem:[#allocation3 + $0x8] sm:$0x3] %v381
        %v384 = vld [vmem:[#allocation2] sm:$0xf]
        %v385 = vld [vmem:[%s5 + $0x2] sm:$0x1]
        %vm386 = vcmp.gt.f32.partialorder %v385, 0.5
        %v387 = vsel %vm386, 1, 0
        %v388 = vlaneseq
        %v389 = vshrl.u32 %v388, 7
        %v390 = vsub.s32 0, %v389
        %v391 = vrot.slane %v387, %v390
        %vm392 = vcmp.eq.s32.totalorder %v391, 1
        %v393 = vsel %vm392, 1, 0
        %v394 = vpack.c.b16 %v393, %v393
        %vm395 = vcmp.ne.s16.totalorder %v394, 0
        %v396 = vsel %vm395, 65537, 0
        %397 = vrot.lane.b32.xlu0 %v396, 18
        %v398 = vpop.permute.xlu0 %397
        %v399 = vrot.slane %v398, 6
        %vm400 = vcmask 146432
        %v401 = vsel %vm400, %v399, %v398
        %vm402 = vcmp.ne.s16.totalorder %v401, 0
        %v403 = vsel %vm402, %v384, 0
        %v405 = vcombine.low %v403, %v403
        %v407 = vunpack.c.l.s4 1983009808
        %v408 = vunpack.c.0.s8 %v407
        %v409 = vlaneseq
        %v410 = vshrl.u32 %v409, 7
        %v411 = vsub.s32 %v408, %v410
        %v412 = vrot.slane %v405, %v411
        %413 = vrot.lane.b32.xlu0 %v412, 110
        %v414 = vpop.permute.xlu0 %413
        %v415 = vrot.slane %v414, 4
        %vm416 = vcmask 900096
        %v417 = vsel %vm416, %v414, %v415
        %419 = vst [vmem:[#allocation3 + $0x8] sm:$0xc] %v417
        %v420 = vld [vmem:[#allocation2] sm:$0xf]
        %v421 = vld [vmem:[%s5] sm:$0x1]
        %vm422 = vcmp.gt.f32.partialorder %v421, 0.5
        %v423 = vsel %vm422, 1, 0
        %v424 = vlaneseq
        %v425 = vshrl.u32 %v424, 7
        %v426 = vsub.s32 0, %v425
        %v427 = vrot.slane %v423, %v426
        %vm428 = vcmp.eq.s32.totalorder %v427, 1
        %v429 = vsel %vm428, 1, 0
        %v430 = vpack.c.b16 %v429, %v429
        %vm431 = vcmp.ne.s16.totalorder %v430, 0
        %v432 = vsel %vm431, 65537, 0
        %433 = vrot.lane.b32.xlu0 %v432, 32
        %v434 = vpop.permute.xlu0 %433
        %v435 = vrot.slane %v434, 6
        %vm436 = vcmask 261120
        %v437 = vsel %vm436, %v435, %v434
        %vm438 = vcmp.ne.s16.totalorder %v437, 0
        %v439 = vsel %vm438, %v420, 0
        %v442 = vunpack.c.l.s4 1983009808
        %v443 = vunpack.c.0.s8 %v442
        %v444 = vlaneseq
        %v445 = vshrl.u32 %v444, 7
        %v446 = vsub.s32 %v443, %v445
        %v447 = vrot.slane %v439, %v446
        %448 = vrot.lane.b32.xlu0 %v447, 96
        %v449 = vpop.permute.xlu0 %448
        %v450 = vrot.slane %v449, 4
        %vm451 = vcmask 785408
        %v452 = vsel %vm451, %v449, %v450
        %454 = vst [vmem:[#allocation3 + $0xc] sm:$0x3] %v452
        %v455 = vld [vmem:[#allocation2] sm:$0xf]
        %v457 = vcombine.low %v455, %v455
        %v459 = vunpack.c.l.s4 1983009808
        %v460 = vunpack.c.0.s8 %v459
        %v461 = vlaneseq
        %v462 = vshrl.u32 %v461, 7
        %v463 = vsub.s32 %v460, %v462
        %v464 = vrot.slane %v457, %v463
        %465 = vrot.lane.b32.xlu0 %v464, 95
        %v466 = vpop.permute.xlu0 %465
        %v467 = vrot.slane %v466, 4
        %vm468 = vcmask 777216
        %v469 = vsel %vm468, %v466, %v467
        %471 = vst [vmem:[#allocation3 + $0xc] sm:$0xc] %v469
        %v472 = vld [vmem:[#allocation2] sm:$0xf]
        %v473 = vld [vmem:[%s5 + $0x2] sm:$0x1]
        %vm474 = vcmp.gt.f32.partialorder %v473, 0.5
        %v475 = vsel %vm474, 1, 0
        %v476 = vlaneseq
        %v477 = vshrl.u32 %v476, 7
        %v478 = vsub.s32 0, %v477
        %v479 = vrot.slane %v475, %v478
        %vm480 = vcmp.eq.s32.totalorder %v479, 1
        %v481 = vsel %vm480, 1, 0
        %v482 = vpack.c.b16 %v481, %v481
        %vm483 = vcmp.ne.s16.totalorder %v482, 0
        %v484 = vsel %vm483, 65537, 0
        %485 = vrot.lane.b32.xlu0 %v484, 34
        %v486 = vpop.permute.xlu0 %485
        %v487 = vrot.slane %v486, 6
        %vm488 = vcmask 277504
        %v489 = vsel %vm488, %v487, %v486
        %vm490 = vcmp.ne.s16.totalorder %v489, 0
        %v491 = vsel %vm490, %v472, 0
        %v494 = vunpack.c.l.s4 1983009808
        %v495 = vunpack.c.0.s8 %v494
        %v496 = vlaneseq
        %v497 = vshrl.u32 %v496, 7
        %v498 = vsub.s32 %v495, %v497
        %v499 = vrot.slane %v491, %v498
        %500 = vrot.lane.b32.xlu0 %v499, 94
        %v501 = vpop.permute.xlu0 %500
        %v502 = vrot.slane %v501, 4
        %vm503 = vcmask 769024
        %v504 = vsel %vm503, %v501, %v502
        %506 = vst [vmem:[#allocation3 + $0x10] sm:$0x3] %v504
        %v507 = vld [vmem:[%s1] sm:$0xf]
        %v508 = vld [vmem:[#allocation3] sm:$0xf]
        %v509 = vld [vmem:[#allocation3 + $0x4] sm:$0xf]
        %v510 = vld [vmem:[#allocation3 + $0x8] sm:$0xf]
        %v511 = vld [vmem:[#allocation3 + $0xc] sm:$0xf]
        %v512 = vld [vmem:[#allocation3 + $0x10] sm:$0x3]
        %v513 = vld [vmem:[%s2] sm:$0xff]
        %515 = vset.pattern.permute.xlu0 0
        %516 = vperm.xlu0 %515, %v513
        %v517 = vpop.permute.xlu0 %516
        %v524 = vunpack.c.l.b16 %v508
        %v525 = vunpack.c.l.b16 %v509
        %v526 = vunpack.c.l.b16 %v510
        %v527 = vunpack.c.l.b16 %v511
        %v528 = vunpack.c.l.b16 %v512
        %v529 = vpack.c.b16 %v525, %v524
        %v530 = vpack.c.b16 %v527, %v526
        %v531 = vpack.c.b16 %v528, %v528
        %vm534 = vcmask 293888
        %v536 = vsel %vm534, %v507, 0
        %vm538 = vcmask 1041408
        %v540 = vsel %vm538, %v531, 0
        %542 = vmatprep.subr.bf16.mxu0 0
        %543 = vmatpush1.bf16.msra.mxu0 0
        %544 = vmatprep.subr.bf16.mxu0 0
        %545 = vmatpush1.bf16.msra.mxu0 0
        %546 = vmatprep.subr.bf16.mxu0 0
        %547 = vmatpush1.bf16.msra.mxu0 0
        %548 = vmatprep.subr.bf16.mxu0 0
        %549 = vmatpush1.bf16.msra.mxu0 0
        %550 = vmatprep.subr.bf16.mxu0 0
        %551 = vmatpush1.bf16.msra.mxu0 0
        %552 = vmatprep.subr.bf16.mxu0 0
        %553 = vmatpush1.bf16.msra.mxu0 %v540
        %554 = vmatprep.subr.bf16.mxu0 0
        %555 = vmatpush1.bf16.msra.mxu0 %v530
        %556 = vmatprep.subr.bf16.mxu0 0
        %557 = vmatpush1.bf16.msra.mxu0 %v529
        %558 = vmatprep.subr.bf16.mxu0 0
        %559 = vmatpush2.bf16.msra.mxu0 0
        %560 = vmatprep.subr.bf16.mxu0 0
        %561 = vmatpush2.bf16.msra.mxu0 0
        %562 = vmatprep.subr.bf16.mxu0 0
        %563 = vmatpush2.bf16.msra.mxu0 0
        %564 = vmatprep.subr.bf16.mxu0 0
        %565 = vmatpush2.bf16.msra.mxu0 0
        %566 = vmatprep.subr.bf16.mxu0 0
        %567 = vmatpush2.bf16.msra.mxu0 0
        %568 = vmatprep.subr.bf16.mxu0 0
        %569 = vmatpush2.bf16.msra.mxu0 0
        %570 = vmatprep.subr.bf16.mxu0 0
        %571 = vmatpush2.bf16.msra.mxu0 0
        %572 = vmatprep.subr.bf16.mxu0 0
        %573 = vmatpush2.bf16.msra.mxu0 0
        %574 = vmatprep.mubr.bf16.mxu0 0
        %575 = vmatmul.mubr.bf16.gmra.mxu0 %v536
        %v576 = vpop.f32.mrf.mxu0
        %v577 = vadd.f32 %v517, %v576
        %v578 = vpop.f32.mrf.mxu0
        %v579 = vpop.f32.mrf.mxu0
        %v580 = vpop.f32.mrf.mxu0
        %581 = vdwg.mxu0
        %v582 = vmax.f32 %v577, 0.0
        %v583 = vpack.c.bf16 %v582, %v582
        %vm584 = vcmask 134144
        %585 = vst.msk [vmem:[#allocation4] sm:$0xf] %vm584, 0
        %vm586 = vcmask 273544
        %587 = vst.msk [vmem:[#allocation4 + $0x4] sm:$0xf] %vm586, 0
        %v589 = vunpack.c.l.b16 %v583
        %v590 = vpack.c.b16 %v589, %v589
        %591 = vrot.lane.b32.xlu0 %v590, 17
        %v592 = vpop.permute.xlu0 %591
        %v593 = vrot.slane %v592, 4
        %v594 = vsel %vm259, %v593, %v592
        %vm596 = vcmask 1043592
        %vm597 = vcmask 138244
        %vm598 = vmor %vm597, %vm596
        %599 = vst.msk [vmem:[#allocation4] sm:$0xff] %vm598, %v594
        %v600 = vld [vmem:[#allocation4] sm:$0xf]
        %v601 = vld [vmem:[%s5] sm:$0x1]
        %vm602 = vcmp.gt.f32.partialorder %v601, 0.5
        %v603 = vsel %vm602, 1, 0
        %v604 = vlaneseq
        %v605 = vshrl.u32 %v604, 7
        %v606 = vsub.s32 0, %v605
        %v607 = vrot.slane %v603, %v606
        %vm608 = vcmp.eq.s32.totalorder %v607, 1
        %vm609 = vmpackc.low %vm608, %vm608
        %v610 = vsel %vm609, %v600, 0
        %611 = vst [vmem:[#allocation5] sm:$0xf] %v610
        %v612 = vld [vmem:[#allocation4] sm:$0xff]
        %614 = vrot.lane.b32.xlu0 %v612, 127
        %v615 = vpop.permute.xlu0 %614
        %v616 = vrot.slane %v615, 4
        %v617 = vsel %vm293, %v615, %v616
        %619 = vst [vmem:[#allocation5 + $0x4] sm:$0xf] %v617
        %v620 = vld [vmem:[#allocation4] sm:$0xff]
        %v621 = vld [vmem:[%s5 + $0x2] sm:$0x1]
        %vm622 = vcmp.gt.f32.partialorder %v621, 0.5
        %v623 = vsel %vm622, 1, 0
        %v624 = vlaneseq
        %v625 = vshrl.u32 %v624, 7
        %v626 = vsub.s32 0, %v625
        %v627 = vrot.slane %v623, %v626
        %vm628 = vcmp.eq.s32.totalorder %v627, 1
        %vm629 = vmpackc.low %vm628, %vm628
        %v630 = vsel %vm629, 65537, 0
        %631 = vrot.lane.b32.xlu0 %v630, 2
        %v632 = vpop.permute.xlu0 %631
        %v633 = vrot.slane %v632, 4
        %v634 = vsel %vm313, %v633, %v632
        %vm635 = vcmp.ne.s16.totalorder %v634, 0
        %v636 = vsel %vm635, %v620, 0
        %638 = vrot.lane.b32.xlu0 %v636, 126
        %v639 = vpop.permute.xlu0 %638
        %v640 = vrot.slane %v639, 4
        %v641 = vsel %vm328, %v639, %v640
        %643 = vst [vmem:[#allocation5 + $0x8] sm:$0xf] %v641
        %v644 = vld [vmem:[#allocation4] sm:$0xff]
        %v645 = vld [vmem:[%s5] sm:$0x1]
        %vm646 = vcmp.gt.f32.partialorder %v645, 0.5
        %v647 = vsel %vm646, 1, 0
        %v648 = vlaneseq
        %v649 = vshrl.u32 %v648, 7
        %v650 = vsub.s32 0, %v649
        %v651 = vrot.slane %v647, %v650
        %vm652 = vcmp.eq.s32.totalorder %v651, 1
        %vm653 = vmpackc.low %vm652, %vm652
        %v654 = vsel %vm653, 65537, 0
        %655 = vrot.lane.b32.xlu0 %v654, 16
        %v656 = vpop.permute.xlu0 %655
        %v657 = vrot.slane %v656, 4
        %v658 = vsel %vm348, %v657, %v656
        %vm659 = vcmp.ne.s16.totalorder %v658, 0
        %v660 = vsel %vm659, %v644, 0
        %662 = vrot.lane.b32.xlu0 %v660, 112
        %v663 = vpop.permute.xlu0 %662
        %v664 = vrot.slane %v663, 4
        %v665 = vsel %vm364, %v663, %v664
        %667 = vst [vmem:[#allocation5 + $0xc] sm:$0xf] %v665
        %v668 = vld [vmem:[#allocation4] sm:$0xff]
        %670 = vrot.lane.b32.xlu0 %v668, 111
        %v671 = vpop.permute.xlu0 %670
        %v672 = vrot.slane %v671, 4
        %v673 = vsel %vm380, %v671, %v672
        %675 = vst [vmem:[#allocation5 + $0x10] sm:$0xf] %v673
        %v676 = vld [vmem:[#allocation4] sm:$0xff]
        %v677 = vld [vmem:[%s5 + $0x2] sm:$0x1]
        %vm678 = vcmp.gt.f32.partialorder %v677, 0.5
        %v679 = vsel %vm678, 1, 0
        %v680 = vlaneseq
        %v681 = vshrl.u32 %v680, 7
        %v682 = vsub.s32 0, %v681
        %v683 = vrot.slane %v679, %v682
        %vm684 = vcmp.eq.s32.totalorder %v683, 1
        %vm685 = vmpackc.low %vm684, %vm684
        %v686 = vsel %vm685, 65537, 0
        %687 = vrot.lane.b32.xlu0 %v686, 18
        %v688 = vpop.permute.xlu0 %687
        %v689 = vrot.slane %v688, 4
        %v690 = vsel %vm400, %v689, %v688
        %vm691 = vcmp.ne.s16.totalorder %v690, 0
        %v692 = vsel %vm691, %v676, 0
        %694 = vrot.lane.b32.xlu0 %v692, 110
        %v695 = vpop.permute.xlu0 %694
        %v696 = vrot.slane %v695, 4
        %v697 = vsel %vm416, %v695, %v696
        %699 = vst [vmem:[#allocation5 + $0x14] sm:$0xf] %v697
        %v700 = vld [vmem:[#allocation4] sm:$0xff]
        %v701 = vld [vmem:[%s5] sm:$0x1]
        %vm702 = vcmp.gt.f32.partialorder %v701, 0.5
        %v703 = vsel %vm702, 1, 0
        %v704 = vlaneseq
        %v705 = vshrl.u32 %v704, 7
        %v706 = vsub.s32 0, %v705
        %v707 = vrot.slane %v703, %v706
        %vm708 = vcmp.eq.s32.totalorder %v707, 1
        %vm709 = vmpackc.low %vm708, %vm708
        %v710 = vsel %vm709, 65537, 0
        %711 = vrot.lane.b32.xlu0 %v710, 32
        %v712 = vpop.permute.xlu0 %711
        %v713 = vrot.slane %v712, 4
        %v714 = vsel %vm436, %v713, %v712
        %vm715 = vcmp.ne.s16.totalorder %v714, 0
        %v716 = vsel %vm715, %v700, 0
        %718 = vrot.lane.b32.xlu0 %v716, 96
        %v719 = vpop.permute.xlu0 %718
        %v720 = vrot.slane %v719, 4
        %v721 = vsel %vm451, %v719, %v720
        %723 = vst [vmem:[#allocation5 + $0x18] sm:$0xf] %v721
        %v724 = vld [vmem:[#allocation4] sm:$0xff]
        %726 = vrot.lane.b32.xlu0 %v724, 95
        %v727 = vpop.permute.xlu0 %726
        %v728 = vrot.slane %v727, 4
        %v729 = vsel %vm468, %v727, %v728
        %731 = vst [vmem:[#allocation5 + $0x1c] sm:$0xf] %v729
        %v732 = vld [vmem:[#allocation4] sm:$0xff]
        %v733 = vld [vmem:[%s5 + $0x2] sm:$0x1]
        %vm734 = vcmp.gt.f32.partialorder %v733, 0.5
        %v735 = vsel %vm734, 1, 0
        %v736 = vlaneseq
        %v737 = vshrl.u32 %v736, 7
        %v738 = vsub.s32 0, %v737
        %v739 = vrot.slane %v735, %v738
        %vm740 = vcmp.eq.s32.totalorder %v739, 1
        %vm741 = vmpackc.low %vm740, %vm740
        %v742 = vsel %vm741, 65537, 0
        %743 = vrot.lane.b32.xlu0 %v742, 34
        %v744 = vpop.permute.xlu0 %743
        %v745 = vrot.slane %v744, 4
        %v746 = vsel %vm488, %v745, %v744
        %vm747 = vcmp.ne.s16.totalorder %v746, 0
        %v748 = vsel %vm747, %v732, 0
        %750 = vrot.lane.b32.xlu0 %v748, 94
        %v751 = vpop.permute.xlu0 %750
        %v752 = vrot.slane %v751, 4
        %v753 = vsel %vm503, %v751, %v752
        %755 = vst [vmem:[#allocation5 + $0x20] sm:$0xf] %v753
        %v756 = vld [vmem:[%s3] sm:$0xf]
        %v757 = vld [vmem:[#allocation5] sm:$0xf]
        %v758 = vld [vmem:[#allocation5 + $0x4] sm:$0xf]
        %v759 = vld [vmem:[#allocation5 + $0x8] sm:$0xf]
        %v760 = vld [vmem:[#allocation5 + $0xc] sm:$0xf]
        %v761 = vld [vmem:[#allocation5 + $0x10] sm:$0xf]
        %v762 = vld [vmem:[#allocation5 + $0x14] sm:$0xf]
        %v763 = vld [vmem:[#allocation5 + $0x18] sm:$0xf]
        %v764 = vld [vmem:[#allocation5 + $0x1c] sm:$0xf]
        %v765 = vld [vmem:[#allocation5 + $0x20] sm:$0xf]
        %v766 = vld [vmem:[%s4] sm:$0xff]
        %768 = vset.pattern.permute.xlu0 0
        %769 = vperm.xlu0 %768, %v766
        %v770 = vpop.permute.xlu0 %769
        %v781 = vunpack.c.l.b16 %v757
        %v782 = vunpack.c.l.b16 %v758
        %v783 = vunpack.c.l.b16 %v759
        %v784 = vunpack.c.l.b16 %v760
        %v785 = vunpack.c.l.b16 %v761
        %v786 = vunpack.c.l.b16 %v762
        %v787 = vunpack.c.l.b16 %v763
        %v788 = vunpack.c.l.b16 %v764
        %v789 = vunpack.c.l.b16 %v765
        %v790 = vpack.c.b16 %v782, %v781
        %v791 = vpack.c.b16 %v784, %v783
        %v792 = vpack.c.b16 %v786, %v785
        %v793 = vpack.c.b16 %v788, %v787
        %v794 = vpack.c.b16 %v789, %v789
        %vm799 = vcmask 588800
        %v801 = vsel %vm799, %v756, 0
        %vm803 = vcmask 1043456
        %v805 = vsel %vm803, %v794, 0
        %807 = vmatprep.subr.bf16.mxu0 0
        %808 = vmatpush1.bf16.msra.mxu0 0
        %809 = vmatprep.subr.bf16.mxu0 0
        %810 = vmatpush1.bf16.msra.mxu0 0
        %811 = vmatprep.subr.bf16.mxu0 0
        %812 = vmatpush1.bf16.msra.mxu0 0
        %813 = vmatprep.subr.bf16.mxu0 0
        %814 = vmatpush1.bf16.msra.mxu0 %v805
        %815 = vmatprep.subr.bf16.mxu0 0
        %816 = vmatpush1.bf16.msra.mxu0 %v793
        %817 = vmatprep.subr.bf16.mxu0 0
        %818 = vmatpush1.bf16.msra.mxu0 %v792
        %819 = vmatprep.subr.bf16.mxu0 0
        %820 = vmatpush1.bf16.msra.mxu0 %v791
        %821 = vmatprep.subr.bf16.mxu0 0
        %822 = vmatpush1.bf16.msra.mxu0 %v790
        %823 = vmatprep.subr.bf16.mxu0 0
        %824 = vmatpush2.bf16.msra.mxu0 0
        %825 = vmatprep.subr.bf16.mxu0 0
        %826 = vmatpush2.bf16.msra.mxu0 0
        %827 = vmatprep.subr.bf16.mxu0 0
        %828 = vmatpush2.bf16.msra.mxu0 0
        %829 = vmatprep.subr.bf16.mxu0 0
        %830 = vmatpush2.bf16.msra.mxu0 0
        %831 = vmatprep.subr.bf16.mxu0 0
        %832 = vmatpush2.bf16.msra.mxu0 0
        %833 = vmatprep.subr.bf16.mxu0 0
        %834 = vmatpush2.bf16.msra.mxu0 0
        %835 = vmatprep.subr.bf16.mxu0 0
        %836 = vmatpush2.bf16.msra.mxu0 0
        %837 = vmatprep.subr.bf16.mxu0 0
        %838 = vmatpush2.bf16.msra.mxu0 0
        %839 = vmatprep.mubr.bf16.mxu0 0
        %840 = vmatmul.mubr.bf16.gmra.mxu0 %v801
        %v841 = vpop.f32.mrf.mxu0
        %v842 = vadd.f32 %v770, %v841
        %v843 = vpop.f32.mrf.mxu0
        %v844 = vpop.f32.mrf.mxu0
        %v845 = vpop.f32.mrf.mxu0
        %846 = vdwg.mxu0
        %v847 = vmax.f32 %v842, 0.0
        %v848 = vpack.c.bf16 %v847, %v847
        %849 = vst [vmem:[%s242] sm:$0xf] %v848
        %s850 = sand.u32 %s159, 1
        %s851 = scalar_lea.sflag [#allocation7], %s850
        %s852 = sand.u32 %s159, 1
        %s853 = smul.addr %s852, 4
        %s854 = scalar_lea.vmem [#allocation6], %s853
        // Predicated region
        $region45: #{tpu_custom_call.1} parent=43 // pred_check
          %p855 = pneg %p169
        $region46: #{tpu_custom_call.1} parent=43 // pred_check_branch
          %857 = sbr.rel (%p855) target = $region48
        $region47: #{tpu_custom_call.1} parent=43 // pred_region
          %s859 = ssub.s32 64, 64
          %860 = vsyncadd %s851, %s859
          %s861 = smul.addr %s20, 64
          %s862 = scalar_lea.hbm %s6, %s861
          %s864 = sshll.u32 %s854, 4
          %s865 = int_to_ptr.vmem [resolvable:$true] %s864
          %867 = dma.vmem_to_hbm [thread:$0]  %s865, 64, %s862, %s851
        $region48: #{tpu_custom_call.1} parent=43 // pred_fallthru
          _
      $region44: #{tpu_custom_call.1} parent=5 // pred_fallthru
        _
      %p868 = scmp.le.s32.totalorder 2, %s15
      // Predicated region
      $region49: #{tpu_custom_call.1} parent=5 // pred_check
        %p869 = pneg %p868
      $region50: #{tpu_custom_call.1} parent=5 // pred_check_branch
        %871 = sbr.rel (%p869) target = $region52
      $region51: #{tpu_custom_call.1} parent=5 // pred_region
        %s872 = ssub.s32 %s15, 2
        // Predicated region
        $region53: #{tpu_custom_call.1} parent=51 // pred_check
          %p873 = pneg %p175
        $region54: #{tpu_custom_call.1} parent=51 // pred_check_branch
          %875 = sbr.rel (%p873) target = $region56
        $region55: #{tpu_custom_call.1} parent=51 // pred_region
          %s876 = sand.u32 %s160, 1
          %s877 = scalar_lea.sflag [#allocation7], %s876
          %s878 = sand.u32 %s160, 1
          %s879 = smul.addr %s878, 4
          %s880 = scalar_lea.vmem [#allocation6], %s879
          %881 = dma.done %s877, 64
        $region56: #{tpu_custom_call.1} parent=51 // pred_fallthru
          _
      $region52: #{tpu_custom_call.1} parent=5 // pred_fallthru
        _
    $region6: #{tpu_custom_call.1} parent=1 // loop_footer
      %s19 = sadd.s32 1, %s15
    $region7: #{tpu_custom_call.1} parent=1 // loop_footer_branch
      %14 = sbr.rel target = $region3
    $region8: #{tpu_custom_call.1} parent=1 // loop_exit
      _
    %882 = vsyncpa [#allocation7], 1
    %s883 = scalar_lea.sflag [#allocation7], 1
    %884 = vsyncpa %s883, 1

</llo_original>
